<compile_context>
chip_gen: v5e
topology: v5e:2x2
jax: 0.10.0
libtpu: 0.0.40
codegen_flags: <defaults>
</compile_context>

<pallas_src>
from functools import partial

import jax
import jax.numpy as jnp
from jax import lax
from jax.experimental import pallas as pl
from jax.experimental.pallas import tpu as pltpu


def _round_up(v, m):
    return -(-v // m) * m


def _patch_merging_kernel(x_ref, wa_ref, wb_ref, bias_ref, o_ref, *, eps, sub_rows):
    # x_ref: (row_tile, 2, Whp, 2C)
    #   x_ref[r, 0] -> channels of column pairs from the even input row = [x0 | x2]
    #   x_ref[r, 1] -> channels of column pairs from the odd  input row = [x1 | x3]
    row_tile, _, Wh, C2 = x_ref.shape
    sub_tokens = sub_rows * Wh
    n_sub = row_tile // sub_rows
    inv_n = 1.0 / float(2 * C2)                       # 1 / (4*dim)

    # Grid-invariant params: load once per grid step, hoisted out of the inner loop.
    wa = wa_ref[...]                                  # (2C, Cout), gamma already folded in
    wb = wb_ref[...]                                  # (2C, Cout)
    bias = bias_ref[...].astype(jnp.float32)          # (1, Cout) = beta @ W

    def body(s, carry):
        r0 = pl.multiple_of(s * sub_rows, sub_rows)
        # Load the two 2C halves directly (never materialize the 4C concat or the
        # full 4-D tile); reshape is a free relabel because Wh is sublane-aligned.
        a = x_ref[pl.ds(r0, sub_rows), 0, :, :].reshape(sub_tokens, C2).astype(jnp.float32)
        b = x_ref[pl.ds(r0, sub_rows), 1, :, :].reshape(sub_tokens, C2).astype(jnp.float32)

        # LayerNorm statistics over the virtual 4C concat: 2 XLU reductions total.
        mean = jnp.sum(a + b, axis=-1, keepdims=True) * inv_n
        ex2 = jnp.sum(a * a + b * b, axis=-1, keepdims=True) * inv_n
        inv = lax.rsqrt(ex2 - mean * mean + eps)      # EUP slot

        na = ((a - mean) * inv).astype(wa.dtype)      # [x0|x2] normalized
        nb = ((b - mean) * inv).astype(wb.dtype)      # [x1|x3] normalized

        # Linear(4C, Cout) with gamma folded into the split weight slabs and beta
        # folded into bias_row; two MXU dots accumulated in f32.
        out = jnp.dot(na, wa, preferred_element_type=jnp.float32)
        out = out + jnp.dot(nb, wb, preferred_element_type=jnp.float32)
        out = out + bias

        t0 = pl.multiple_of(s * sub_tokens, sub_tokens)
        o_ref[pl.ds(t0, sub_tokens), :] = out.astype(o_ref.dtype)
        return carry

    lax.fori_loop(0, n_sub, body, 0, unroll=n_sub <= 8)


def patch_merging_forward(x, gamma, beta, w, *, eps=1e-5, mxu_dtype=None):
    """x: (B, C, H, W); gamma/beta: (4C,); w: (4C, 2C) (= reduction.weight.T).

    Returns (B, ceil(H/2)*ceil(W/2), 2C), matching PatchMerging.forward.
    mxu_dtype: dtype used for the matmul operands (weights + normalized activations).
               Defaults to x.dtype; pass jnp.bfloat16 for bf16 models.
    """
    B, C, H, W = x.shape
    C2 = 2 * C
    Cout = w.shape[1]
    if mxu_dtype is None:
        mxu_dtype = x.dtype

    # PyTorch x.view(B, H, W, C) == flat-buffer reinterpretation (NOT a transpose).
    xv = x.reshape(B, H, W, C)
    if H % 2 or W % 2:
        xv = jnp.pad(xv, ((0, 0), (0, H % 2), (0, W % 2), (0, 0)))
    Hp, Wp = xv.shape[1], xv.shape[2]
    Hh, Wh = Hp // 2, Wp // 2

    # Sublane-alignment guard: the in-kernel (rows, Wh, 2C)->(rows*Wh, 2C) collapse is
    # only a free relabel when Wh is a multiple of the sublane tiling (8 f32 / 16 bf16).
    itemsize = jnp.dtype(x.dtype).itemsize
    lane_rows = max(8, 8 * (4 // max(1, itemsize)))
    Whp = _round_up(max(Wh, 1), lane_rows)
    if 2 * Whp != Wp:
        xv = jnp.pad(xv, ((0, 0), (0, 0), (0, 2 * Whp - Wp), (0, 0)))

    # Free reshape: (B, Hp, 2*Whp, C) -> (B*Hh, 2, Whp, 2C). Last dim = 2C (lane-dense).
    xr = xv.reshape(B * Hh, 2, Whp, C2)
    M_total = B * Hh

    # ---------------- tile selection ----------------
    # Inner compute sub-block: ~256 merged tokens (keeps live f32 intermediates small).
    sub_rows = max(1, 256 // Whp)
    sub_rows = min(sub_rows, M_total)
    sub_rows = max(1, sub_rows)

    # Grid-step tile: target ~4096 merged tokens, capped so the double-buffered
    # input + output blocks stay within a v7x-safe VMEM budget.
    def _block_bytes(rt):
        in_b = rt * 2 * Whp * C2 * itemsize
        out_b = rt * Whp * Cout * itemsize
        return 2 * (in_b + out_b)

    budget = 20 * 1024 * 1024
    mult = max(1, 4096 // (sub_rows * Whp))
    while mult > 1 and _block_bytes(sub_rows * mult) > budget:
        mult -= 1
    row_tile = min(sub_rows * mult, _round_up(M_total, sub_rows))

    num_steps = -(-M_total // row_tile)
    # v7x has 2 TensorCores sharded over the "parallel" grid axis: avoid a 1-step
    # grid for non-trivial inputs.
    if num_steps == 1 and M_total > sub_rows and M_total * Whp >= 4096:
        row_tile = _round_up(-(-M_total // 2), sub_rows)
        num_steps = -(-M_total // row_tile)

    M_pad = num_steps * row_tile
    if M_pad != M_total:
        xr = jnp.pad(xr, ((0, M_pad - M_total), (0, 0), (0, 0), (0, 0)))

    # ---------------- fold LN affine into the Linear weights ----------------
    # In-kernel halves are [x0|x2] and [x1|x3]; the module's concat order is
    # [x0, x1, x2, x3], so permute gamma/W rows accordingly.
    ga = jnp.concatenate([gamma[0:C], gamma[2 * C:3 * C]])
    gb = jnp.concatenate([gamma[C:2 * C], gamma[3 * C:4 * C]])
    wa = (ga[:, None] * jnp.concatenate([w[0:C], w[2 * C:3 * C]], axis=0)).astype(mxu_dtype)
    wb = (gb[:, None] * jnp.concatenate([w[C:2 * C], w[3 * C:4 * C]], axis=0)).astype(mxu_dtype)
    bias = (beta[None, :].astype(jnp.float32) @ w.astype(jnp.float32))    # (1, Cout)

    w_item = jnp.dtype(mxu_dtype).itemsize
    est = _block_bytes(row_tile) + 2 * 2 * C2 * Cout * w_item + 2 * Cout * 4
    vmem_limit = int(min(48 * 1024 * 1024, max(32 * 1024 * 1024, round(est * 1.5))))

    out_flat = pl.pallas_call(
        partial(_patch_merging_kernel, eps=float(eps), sub_rows=sub_rows),
        out_shape=jax.ShapeDtypeStruct((M_pad * Whp, Cout), x.dtype),
        grid_spec=pltpu.PrefetchScalarGridSpec(
            num_scalar_prefetch=0,
            grid=(num_steps,),
            in_specs=[
                pl.BlockSpec((row_tile, 2, Whp, C2), lambda i: (i, 0, 0, 0)),
                # Grid-invariant weight slabs / bias (re-DMA is skipped since the
                # block index never changes).
                pl.BlockSpec((C2, Cout), lambda i: (0, 0)),   # W slab for [x0|x2]
                pl.BlockSpec((C2, Cout), lambda i: (0, 0)),   # W slab for [x1|x3]
                pl.BlockSpec((1, Cout), lambda i: (0, 0)),    # beta @ W
            ],
            out_specs=pl.BlockSpec((row_tile * Whp, Cout), lambda i: (i, 0)),
        ),
        compiler_params=pltpu.CompilerParams(
            dimension_semantics=("parallel",),
            vmem_limit_bytes=vmem_limit),
    )(xr, wa, wb, bias)

    # Drop alignment padding (extra merged rows and extra merged columns).
    out = out_flat.reshape(M_pad, Whp, Cout)[:M_total, :Wh, :]
    return out.reshape(B, Hh * Wh, Cout)


def patch_merging_reference(x, gamma, beta, w, eps=1e-5):
    """Plain-JAX reference with the exact PyTorch module semantics."""
    B, C, H, W = x.shape
    xv = x.reshape(B, H, W, C)
    if H % 2 or W % 2:
        xv = jnp.pad(xv, ((0, 0), (0, H % 2), (0, W % 2), (0, 0)))
    x0 = xv[:, 0::2, 0::2, :]
    x1 = xv[:, 1::2, 0::2, :]
    x2 = xv[:, 0::2, 1::2, :]
    x3 = xv[:, 1::2, 1::2, :]
    cat = jnp.concatenate([x0, x1, x2, x3], axis=-1).reshape(B, -1, 4 * C)
    mu = jnp.mean(cat, axis=-1, keepdims=True)
    var = jnp.mean((cat - mu) ** 2, axis=-1, keepdims=True)
    y = (cat - mu) / jnp.sqrt(var + eps) * gamma + beta
    return jnp.einsum('bmc,cd->bmd', y, w)


if __name__ == "__main__":
    # PatchMerging(dim=64): input (B, C, H, W) = (2, 64, 16, 16)
    # dim=64 keeps the kernel lane-dense: 2C = 128 lanes, Cout = 128 lanes.
    B, dim = 2, 64
    C4, Cout = 4 * dim, 2 * dim

    key = jax.random.PRNGKey(0)
    kx, kw, kx2 = jax.random.split(key, 3)

    gamma = 1.0 + 0.01 * jnp.arange(C4, dtype=jnp.float32)
    beta = 0.01 * jnp.arange(C4, dtype=jnp.float32) - 0.5
    w = 0.05 * jax.random.normal(kw, (C4, Cout), dtype=jnp.float32)

    # Main case: even, aligned spatial dims.
    H, W = 16, 16
    x = jax.random.normal(kx, (B, dim, H, W), dtype=jnp.float32)
    out = jax.block_until_ready(patch_merging_forward(x, gamma, beta, w))
    ref = patch_merging_reference(x, gamma, beta, w)
    assert out.shape == (B, (H // 2) * (W // 2), Cout)
    assert jnp.allclose(out, ref, rtol=1e-4, atol=1e-4), "mismatch vs reference (16x16)"

    # Odd / unaligned case: exercises the even-pad and the Wh%8 alignment guard
    # (Swin's real stages hit Wh = 7 / 14).
    H2, W2 = 15, 14
    x2 = jax.random.normal(kx2, (B, dim, H2, W2), dtype=jnp.float32)
    out2 = jax.block_until_ready(patch_merging_forward(x2, gamma, beta, w))
    ref2 = patch_merging_reference(x2, gamma, beta, w)
    assert out2.shape == (B, ((H2 + 1) // 2) * ((W2 + 1) // 2), Cout)
    assert jnp.allclose(out2, ref2, rtol=1e-4, atol=1e-4), "mismatch vs reference (15x14)"

    print("KERNEL_OK")
</pallas_src>

<mosaic_0001>
module attributes {stable_mosaic.version = 11 : i64} {
  func.func @_patch_merging_kernel(%arg0: i32, %arg1: memref<16x2x8x128xf32, #tpu.memory_space<vmem>>, %arg2: memref<128x128xf32, #tpu.memory_space<vmem>>, %arg3: memref<128x128xf32, #tpu.memory_space<vmem>>, %arg4: memref<1x128xf32, #tpu.memory_space<vmem>>, %arg5: memref<128x128xf32, #tpu.memory_space<vmem>>) attributes {dimension_semantics = [#tpu.dimension_semantics<parallel>], iteration_bounds = array<i64: 1>, scalar_prefetch = 0 : i64, scratch_operands = 0 : i64, tpu.core_type = #tpu.core_type<tc>, window_params = [{transform_indices = @transform_0, window_bounds = array<i64: 16, 2, 8, 128>}, {pipeline_mode = #tpu.pipeline_mode<synchronous>, transform_indices = @transform_1, window_bounds = array<i64: 128, 128>}, {pipeline_mode = #tpu.pipeline_mode<synchronous>, transform_indices = @transform_2, window_bounds = array<i64: 128, 128>}, {pipeline_mode = #tpu.pipeline_mode<synchronous>, transform_indices = @transform_3, window_bounds = array<i64: 1, 128>}, {transform_indices = @transform_4, window_bounds = array<i64: 128, 128>}]} {
    %c0 = arith.constant 0 : index
    %c0_0 = arith.constant 0 : index
    %0 = vector.load %arg2[%c0, %c0_0] : memref<128x128xf32, #tpu.memory_space<vmem>>, vector<128x128xf32>
    %c0_1 = arith.constant 0 : index
    %c0_2 = arith.constant 0 : index
    %1 = vector.load %arg3[%c0_1, %c0_2] : memref<128x128xf32, #tpu.memory_space<vmem>>, vector<128x128xf32>
    %c0_3 = arith.constant 0 : index
    %c0_4 = arith.constant 0 : index
    %2 = vector.load %arg4[%c0_3, %c0_4] : memref<1x128xf32, #tpu.memory_space<vmem>>, vector<1x128xf32>
    %c0_i32 = arith.constant 0 : i32
    %c16_i32 = arith.constant 16 : i32
    %3 = arith.muli %c0_i32, %c16_i32 : i32
    %4 = tpu.assume_multiple %3, 16 : i32
    %5 = arith.index_cast %4 : i32 to index
    %c0_5 = arith.constant 0 : index
    %c0_6 = arith.constant 0 : index
    %c0_7 = arith.constant 0 : index
    %6 = vector.load %arg1[%5, %c0_5, %c0_6, %c0_7] : memref<16x2x8x128xf32, #tpu.memory_space<vmem>>, vector<16x1x8x128xf32>
    %7 = vector.shape_cast %6 : vector<16x1x8x128xf32> to vector<16x8x128xf32>
    %8 = vector.shape_cast %7 : vector<16x8x128xf32> to vector<128x128xf32>
    %9 = arith.index_cast %4 : i32 to index
    %c1 = arith.constant 1 : index
    %c0_8 = arith.constant 0 : index
    %c0_9 = arith.constant 0 : index
    %10 = vector.load %arg1[%9, %c1, %c0_8, %c0_9] : memref<16x2x8x128xf32, #tpu.memory_space<vmem>>, vector<16x1x8x128xf32>
    %11 = vector.shape_cast %10 : vector<16x1x8x128xf32> to vector<16x8x128xf32>
    %12 = vector.shape_cast %11 : vector<16x8x128xf32> to vector<128x128xf32>
    %13 = arith.addf %8, %12 : vector<128x128xf32>
    %cst = arith.constant dense<0.000000e+00> : vector<128xf32>
    %14 = vector.multi_reduction <add>, %13, %cst [1] : vector<128x128xf32> to vector<128xf32>
    %15 = vector.shape_cast %14 : vector<128xf32> to vector<128x1xf32>
    %cst_10 = arith.constant 3.906250e-03 : f32
    %16 = vector.broadcast %cst_10 : f32 to vector<128x1xf32>
    %17 = arith.mulf %15, %16 : vector<128x1xf32>
    %18 = arith.mulf %8, %8 : vector<128x128xf32>
    %19 = arith.mulf %12, %12 : vector<128x128xf32>
    %20 = arith.addf %18, %19 : vector<128x128xf32>
    %cst_11 = arith.constant dense<0.000000e+00> : vector<128xf32>
    %21 = vector.multi_reduction <add>, %20, %cst_11 [1] : vector<128x128xf32> to vector<128xf32>
    %22 = vector.shape_cast %21 : vector<128xf32> to vector<128x1xf32>
    %cst_12 = arith.constant 3.906250e-03 : f32
    %23 = vector.broadcast %cst_12 : f32 to vector<128x1xf32>
    %24 = arith.mulf %22, %23 : vector<128x1xf32>
    %25 = arith.mulf %17, %17 : vector<128x1xf32>
    %26 = arith.subf %24, %25 : vector<128x1xf32>
    %cst_13 = arith.constant 9.99999974E-6 : f32
    %27 = vector.broadcast %cst_13 : f32 to vector<128x1xf32>
    %28 = arith.addf %26, %27 : vector<128x1xf32>
    %29 = math.rsqrt %28 : vector<128x1xf32>
    %30 = vector.broadcast %17 : vector<128x1xf32> to vector<128x128xf32>
    %31 = arith.subf %8, %30 : vector<128x128xf32>
    %32 = vector.broadcast %29 : vector<128x1xf32> to vector<128x128xf32>
    %33 = arith.mulf %31, %32 : vector<128x128xf32>
    %34 = vector.broadcast %17 : vector<128x1xf32> to vector<128x128xf32>
    %35 = arith.subf %12, %34 : vector<128x128xf32>
    %36 = vector.broadcast %29 : vector<128x1xf32> to vector<128x128xf32>
    %37 = arith.mulf %35, %36 : vector<128x128xf32>
    %cst_14 = arith.constant dense<0.000000e+00> : vector<128x128xf32>
    %38 = tpu.matmul %33, %0, %cst_14 {dimension_numbers = #tpu.dot_dimension_numbers<[1], [0], [0], [1], [0, 0, 1, 1], [], []>} : vector<128x128xf32>, vector<128x128xf32>, vector<128x128xf32> -> vector<128x128xf32>
    %cst_15 = arith.constant dense<0.000000e+00> : vector<128x128xf32>
    %39 = tpu.matmul %37, %1, %cst_15 {dimension_numbers = #tpu.dot_dimension_numbers<[1], [0], [0], [1], [0, 0, 1, 1], [], []>} : vector<128x128xf32>, vector<128x128xf32>, vector<128x128xf32> -> vector<128x128xf32>
    %40 = arith.addf %38, %39 : vector<128x128xf32>
    %41 = vector.broadcast %2 : vector<1x128xf32> to vector<128x128xf32>
    %42 = arith.addf %40, %41 : vector<128x128xf32>
    %c128_i32 = arith.constant 128 : i32
    %43 = arith.muli %c0_i32, %c128_i32 : i32
    %44 = tpu.assume_multiple %43, 128 : i32
    %45 = arith.index_cast %44 : i32 to index
    %c0_16 = arith.constant 0 : index
    %46 = vector.load %arg5[%45, %c0_16] : memref<128x128xf32, #tpu.memory_space<vmem>>, vector<128x128xf32>
    tpu.vector_store %arg5[%45, %c0_16], %42 {strides = array<i32>} : memref<128x128xf32, #tpu.memory_space<vmem>>, vector<128x128xf32>,
    %c1_i32 = arith.constant 1 : i32
    return
  }
  func.func @transform_0(%arg0: i32) -> (i32, i32, i32, i32) {
    %c0_i32 = arith.constant 0 : i32
    %c0_i32_0 = arith.constant 0 : i32
    %c0_i32_1 = arith.constant 0 : i32
    %c0_i32_2 = arith.constant 0 : i32
    return %arg0, %c0_i32, %c0_i32_0, %c0_i32_1 : i32, i32, i32, i32
  }
  func.func @transform_1(%arg0: i32) -> (i32, i32) {
    %c0_i32 = arith.constant 0 : i32
    %c0_i32_0 = arith.constant 0 : i32
    %c0_i32_1 = arith.constant 0 : i32
    return %c0_i32, %c0_i32_0 : i32, i32
  }
  func.func @transform_2(%arg0: i32) -> (i32, i32) {
    %c0_i32 = arith.constant 0 : i32
    %c0_i32_0 = arith.constant 0 : i32
    %c0_i32_1 = arith.constant 0 : i32
    return %c0_i32, %c0_i32_0 : i32, i32
  }
  func.func @transform_3(%arg0: i32) -> (i32, i32) {
    %c0_i32 = arith.constant 0 : i32
    %c0_i32_0 = arith.constant 0 : i32
    %c0_i32_1 = arith.constant 0 : i32
    return %c0_i32, %c0_i32_0 : i32, i32
  }
  func.func @transform_4(%arg0: i32) -> (i32, i32) {
    %c0_i32 = arith.constant 0 : i32
    %c0_i32_0 = arith.constant 0 : i32
    return %arg0, %c0_i32 : i32, i32
  }
}

</mosaic_0001>

<llo_original>
// kernel: tpu_custom_call.1
$region0: #{tpu_custom_call.1}
  #allocation0 [shape = 'u32[]', space=smem, size = 0x4, offset = 0x4, fixed_abs, tag = 'smem constant byte address 0x4 - core index']
  #allocation1 [shape = 'u32[72,128]{1,0:T(1,128)}', space=vmem, size = 0x9000, scoped, tag = 'internal scratch']
  %s0 = inlined_call_operand.hbm [shape: f32[16,2,8,128], index: 0, kind: input, shape index: {}]
  %s1 = inlined_call_operand.hbm [shape: f32[128,128], index: 1, kind: input, shape index: {}]
  %s2 = inlined_call_operand.hbm [shape: f32[128,128], index: 2, kind: input, shape index: {}]
  %s3 = inlined_call_operand.vmem [shape: f32[1,128], index: 3, kind: input, shape index: {}]
  %s4 = inlined_call_operand.hbm [shape: f32[128,128], index: 4, kind: output, shape index: {}]
  %s5 = sld [smem:[#allocation0]]
  $region38: #{tpu_custom_call.1} parent=0
    _
  %s7 = ssub.s32 1, %s5
  %s8 = scalar_select 0, %s7, %s5
  $region1: #{tpu_custom_call.1} parent=0
    #allocation2 [shape = 'u8[131072]{0}', space=vmem, size = 0x20000, scoped, tag = 'input window, operand 0, single buffered']
    #allocation3 [shape = 's32[1]{0}', space=sflag, size = 0x4, scoped, tag = 'scoped memory for tpu_custom_call.1']
    #allocation4 [shape = 's32[1]{0}', space=sflag, size = 0x4, scoped, tag = 'scoped memory for tpu_custom_call.1']
    #allocation5 [shape = 'u8[65536]{0}', space=vmem, size = 0x10000, scoped, tag = 'input window, operand 1, single buffered']
    #allocation6 [shape = 's32[1]{0}', space=sflag, size = 0x4, scoped, tag = 'scoped memory for tpu_custom_call.1']
    #allocation7 [shape = 'u8[65536]{0}', space=vmem, size = 0x10000, scoped, tag = 'input window, operand 2, single buffered']
    #allocation8 [shape = 'u8[65536]{0}', space=vmem, size = 0x10000, scoped, tag = 'output window, operand 0, single buffered']
    %9 = vsyncpa [#allocation3], 0
    %10 = vsyncpa [#allocation6], 0
    %11 = vsyncpa [#allocation4], 0
    // Predicated region
    $region2: #{tpu_custom_call.1} parent=1 // pred_check
      _
    $region3: #{tpu_custom_call.1} parent=1 // pred_check_branch
      %13 = sbr.rel (0) target = $region5
    $region4: #{tpu_custom_call.1} parent=1 // pred_region
      %15 = vsyncadd [#allocation3], 0
      %s16 = sshll.u32 %s0, 4
      %s17 = int_to_ptr.hbm [resolvable:$true] %s16
      %s18 = sshll.u32 [#allocation2], 4
      %s19 = int_to_ptr.vmem [resolvable:$true] %s18
      %24 = dma.hbm_to_vmem [thread:$0]  %s17, 4096, %s19, [#allocation3], 128, 128, 8
    $region5: #{tpu_custom_call.1} parent=1 // pred_fallthru
      _
    // Predicated region
    $region6: #{tpu_custom_call.1} parent=1 // pred_check
      _
    $region7: #{tpu_custom_call.1} parent=1 // pred_check_branch
      %26 = sbr.rel (0) target = $region9
    $region8: #{tpu_custom_call.1} parent=1 // pred_region
      %28 = vsyncadd [#allocation6], 0
      %s29 = sshll.u32 %s1, 4
      %s30 = int_to_ptr.hbm [resolvable:$true] %s29
      %s31 = sshll.u32 [#allocation5], 4
      %s32 = int_to_ptr.vmem [resolvable:$true] %s31
      %37 = dma.hbm_to_vmem [thread:$0]  %s30, 2048, %s32, [#allocation6], 128, 128, 8
    $region9: #{tpu_custom_call.1} parent=1 // pred_fallthru
      _
    // Predicated region
    $region10: #{tpu_custom_call.1} parent=1 // pred_check
      _
    $region11: #{tpu_custom_call.1} parent=1 // pred_check_branch
      %39 = sbr.rel (0) target = $region13
    $region12: #{tpu_custom_call.1} parent=1 // pred_region
      %41 = vsyncadd [#allocation6], 0
      %s42 = sshll.u32 %s2, 4
      %s43 = int_to_ptr.hbm [resolvable:$true] %s42
      %s44 = sshll.u32 [#allocation7], 4
      %s45 = int_to_ptr.vmem [resolvable:$true] %s44
      %50 = dma.hbm_to_vmem [thread:$0]  %s43, 2048, %s45, [#allocation6], 128, 128, 8
    $region13: #{tpu_custom_call.1} parent=1 // pred_fallthru
      _
    // Predicated region
    $region14: #{tpu_custom_call.1} parent=1 // pred_check
      _
    $region15: #{tpu_custom_call.1} parent=1 // pred_check_branch
      %52 = sbr.rel (0) target = $region17
    $region16: #{tpu_custom_call.1} parent=1 // pred_region
      _
    $region17: #{tpu_custom_call.1} parent=1 // pred_fallthru
      _
    // Predicated region
    $region18: #{tpu_custom_call.1} parent=1 // pred_check
      _
    $region19: #{tpu_custom_call.1} parent=1 // pred_check_branch
      %54 = sbr.rel (0) target = $region21
    $region20: #{tpu_custom_call.1} parent=1 // pred_region
      %56 = dma.done [#allocation3], 4096
    $region21: #{tpu_custom_call.1} parent=1 // pred_fallthru
      _
    // Predicated region
    $region22: #{tpu_custom_call.1} parent=1 // pred_check
      _
    $region23: #{tpu_custom_call.1} parent=1 // pred_check_branch
      %58 = sbr.rel (0) target = $region25
    $region24: #{tpu_custom_call.1} parent=1 // pred_region
      %60 = dma.done [#allocation6], 2048
    $region25: #{tpu_custom_call.1} parent=1 // pred_fallthru
      _
    // Predicated region
    $region26: #{tpu_custom_call.1} parent=1 // pred_check
      _
    $region27: #{tpu_custom_call.1} parent=1 // pred_check_branch
      %62 = sbr.rel (0) target = $region29
    $region28: #{tpu_custom_call.1} parent=1 // pred_region
      %64 = dma.done [#allocation6], 2048
    $region29: #{tpu_custom_call.1} parent=1 // pred_fallthru
      _
    %v65 = vld [vmem:[#allocation5] sm:$0xff]
    %v66 = vld [vmem:[#allocation5 + $0x8] sm:$0xff]
    %v67 = vld [vmem:[#allocation5 + $0x10] sm:$0xff]
    %v68 = vld [vmem:[#allocation5 + $0x18] sm:$0xff]
    %v69 = vld [vmem:[#allocation5 + $0x20] sm:$0xff]
    %v70 = vld [vmem:[#allocation5 + $0x28] sm:$0xff]
    %v71 = vld [vmem:[#allocation5 + $0x30] sm:$0xff]
    %v72 = vld [vmem:[#allocation5 + $0x38] sm:$0xff]
    %v73 = vld [vmem:[#allocation5 + $0x40] sm:$0xff]
    %v74 = vld [vmem:[#allocation5 + $0x48] sm:$0xff]
    %v75 = vld [vmem:[#allocation5 + $0x50] sm:$0xff]
    %v76 = vld [vmem:[#allocation5 + $0x58] sm:$0xff]
    %v77 = vld [vmem:[#allocation5 + $0x60] sm:$0xff]
    %v78 = vld [vmem:[#allocation5 + $0x68] sm:$0xff]
    %v79 = vld [vmem:[#allocation5 + $0x70] sm:$0xff]
    %v80 = vld [vmem:[#allocation5 + $0x78] sm:$0xff]
    %v81 = vld [vmem:[#allocation7] sm:$0xff]
    %v82 = vld [vmem:[#allocation7 + $0x8] sm:$0xff]
    %v83 = vld [vmem:[#allocation7 + $0x10] sm:$0xff]
    %v84 = vld [vmem:[#allocation7 + $0x18] sm:$0xff]
    %v85 = vld [vmem:[#allocation7 + $0x20] sm:$0xff]
    %v86 = vld [vmem:[#allocation7 + $0x28] sm:$0xff]
    %v87 = vld [vmem:[#allocation7 + $0x30] sm:$0xff]
    %v88 = vld [vmem:[#allocation7 + $0x38] sm:$0xff]
    %v89 = vld [vmem:[#allocation7 + $0x40] sm:$0xff]
    %v90 = vld [vmem:[#allocation7 + $0x48] sm:$0xff]
    %v91 = vld [vmem:[#allocation7 + $0x50] sm:$0xff]
    %v92 = vld [vmem:[#allocation7 + $0x58] sm:$0xff]
    %v93 = vld [vmem:[#allocation7 + $0x60] sm:$0xff]
    %v94 = vld [vmem:[#allocation7 + $0x68] sm:$0xff]
    %v95 = vld [vmem:[#allocation7 + $0x70] sm:$0xff]
    %v96 = vld [vmem:[#allocation7 + $0x78] sm:$0xff]
    %v97 = vld [vmem:[%s3] sm:$0x1]
    %s98 = smul.u32 0, 16
    %s99 = scalar_lea.vmem [#allocation2], %s98
    %v100 = vld [vmem:[%s99] sm:$0xff]
    %v101 = vld [vmem:[%s99 + $0x10] sm:$0xff]
    %v102 = vld [vmem:[%s99 + $0x20] sm:$0xff]
    %v103 = vld [vmem:[%s99 + $0x30] sm:$0xff]
    %v104 = vld [vmem:[%s99 + $0x40] sm:$0xff]
    %v105 = vld [vmem:[%s99 + $0x50] sm:$0xff]
    %v106 = vld [vmem:[%s99 + $0x60] sm:$0xff]
    %v107 = vld [vmem:[%s99 + $0x70] sm:$0xff]
    %v108 = vld [vmem:[%s99 + $0x80] sm:$0xff]
    %v109 = vld [vmem:[%s99 + $0x90] sm:$0xff]
    %v110 = vld [vmem:[%s99 + $0xa0] sm:$0xff]
    %v111 = vld [vmem:[%s99 + $0xb0] sm:$0xff]
    %v112 = vld [vmem:[%s99 + $0xc0] sm:$0xff]
    %v113 = vld [vmem:[%s99 + $0xd0] sm:$0xff]
    %v114 = vld [vmem:[%s99 + $0xe0] sm:$0xff]
    %v115 = vld [vmem:[%s99 + $0xf0] sm:$0xff]
    %s116 = sadd.s32 8, %s98
    %s117 = scalar_lea.vmem [#allocation2], %s116
    %v118 = vld [vmem:[%s117] sm:$0xff]
    %v119 = vld [vmem:[%s117 + $0x10] sm:$0xff]
    %v120 = vld [vmem:[%s117 + $0x20] sm:$0xff]
    %v121 = vld [vmem:[%s117 + $0x30] sm:$0xff]
    %v122 = vld [vmem:[%s117 + $0x40] sm:$0xff]
    %v123 = vld [vmem:[%s117 + $0x50] sm:$0xff]
    %v124 = vld [vmem:[%s117 + $0x60] sm:$0xff]
    %v125 = vld [vmem:[%s117 + $0x70] sm:$0xff]
    %v126 = vld [vmem:[%s117 + $0x80] sm:$0xff]
    %v127 = vld [vmem:[%s117 + $0x90] sm:$0xff]
    %v128 = vld [vmem:[%s117 + $0xa0] sm:$0xff]
    %v129 = vld [vmem:[%s117 + $0xb0] sm:$0xff]
    %v130 = vld [vmem:[%s117 + $0xc0] sm:$0xff]
    %v131 = vld [vmem:[%s117 + $0xd0] sm:$0xff]
    %v132 = vld [vmem:[%s117 + $0xe0] sm:$0xff]
    %v133 = vld [vmem:[%s117 + $0xf0] sm:$0xff]
    %v134 = vadd.f32 %v100, %v118
    %v135 = vadd.f32 %v101, %v119
    %v136 = vadd.f32 %v102, %v120
    %v137 = vadd.f32 %v103, %v121
    %v138 = vadd.f32 %v104, %v122
    %v139 = vadd.f32 %v105, %v123
    %v140 = vadd.f32 %v106, %v124
    %v141 = vadd.f32 %v107, %v125
    %v142 = vadd.f32 %v108, %v126
    %v143 = vadd.f32 %v109, %v127
    %v144 = vadd.f32 %v110, %v128
    %v145 = vadd.f32 %v111, %v129
    %v146 = vadd.f32 %v112, %v130
    %v147 = vadd.f32 %v113, %v131
    %v148 = vadd.f32 %v114, %v132
    %v149 = vadd.f32 %v115, %v133
    %150 = vadd.xlane.f32.xlu0 %v134
    %v151 = vpop.xlane.xlu0 %150
    %152 = vadd.xlane.f32.xlu0 %v135
    %v153 = vpop.xlane.xlu0 %152
    %154 = vadd.xlane.f32.xlu0 %v136
    %v155 = vpop.xlane.xlu0 %154
    %156 = vadd.xlane.f32.xlu0 %v137
    %v157 = vpop.xlane.xlu0 %156
    %158 = vadd.xlane.f32.xlu0 %v138
    %v159 = vpop.xlane.xlu0 %158
    %160 = vadd.xlane.f32.xlu0 %v139
    %v161 = vpop.xlane.xlu0 %160
    %162 = vadd.xlane.f32.xlu0 %v140
    %v163 = vpop.xlane.xlu0 %162
    %164 = vadd.xlane.f32.xlu0 %v141
    %v165 = vpop.xlane.xlu0 %164
    %166 = vadd.xlane.f32.xlu0 %v142
    %v167 = vpop.xlane.xlu0 %166
    %168 = vadd.xlane.f32.xlu0 %v143
    %v169 = vpop.xlane.xlu0 %168
    %170 = vadd.xlane.f32.xlu0 %v144
    %v171 = vpop.xlane.xlu0 %170
    %172 = vadd.xlane.f32.xlu0 %v145
    %v173 = vpop.xlane.xlu0 %172
    %174 = vadd.xlane.f32.xlu0 %v146
    %v175 = vpop.xlane.xlu0 %174
    %176 = vadd.xlane.f32.xlu0 %v147
    %v177 = vpop.xlane.xlu0 %176
    %178 = vadd.xlane.f32.xlu0 %v148
    %v179 = vpop.xlane.xlu0 %178
    %180 = vadd.xlane.f32.xlu0 %v149
    %v181 = vpop.xlane.xlu0 %180
    %v182 = vmul.f32 %v151, 0.00390625
    %v183 = vmul.f32 %v153, 0.00390625
    %v184 = vmul.f32 %v155, 0.00390625
    %v185 = vmul.f32 %v157, 0.00390625
    %v186 = vmul.f32 %v159, 0.00390625
    %v187 = vmul.f32 %v161, 0.00390625
    %v188 = vmul.f32 %v163, 0.00390625
    %v189 = vmul.f32 %v165, 0.00390625
    %v190 = vmul.f32 %v167, 0.00390625
    %v191 = vmul.f32 %v169, 0.00390625
    %v192 = vmul.f32 %v171, 0.00390625
    %v193 = vmul.f32 %v173, 0.00390625
    %v194 = vmul.f32 %v175, 0.00390625
    %v195 = vmul.f32 %v177, 0.00390625
    %v196 = vmul.f32 %v179, 0.00390625
    %v197 = vmul.f32 %v181, 0.00390625
    %v198 = vmul.f32 %v100, %v100
    %v199 = vmul.f32 %v101, %v101
    %v200 = vmul.f32 %v102, %v102
    %v201 = vmul.f32 %v103, %v103
    %v202 = vmul.f32 %v104, %v104
    %v203 = vmul.f32 %v105, %v105
    %v204 = vmul.f32 %v106, %v106
    %v205 = vmul.f32 %v107, %v107
    %v206 = vmul.f32 %v108, %v108
    %v207 = vmul.f32 %v109, %v109
    %v208 = vmul.f32 %v110, %v110
    %v209 = vmul.f32 %v111, %v111
    %v210 = vmul.f32 %v112, %v112
    %v211 = vmul.f32 %v113, %v113
    %v212 = vmul.f32 %v114, %v114
    %v213 = vmul.f32 %v115, %v115
    %v214 = vmul.f32 %v118, %v118
    %v215 = vmul.f32 %v119, %v119
    %v216 = vmul.f32 %v120, %v120
    %v217 = vmul.f32 %v121, %v121
    %v218 = vmul.f32 %v122, %v122
    %v219 = vmul.f32 %v123, %v123
    %v220 = vmul.f32 %v124, %v124
    %v221 = vmul.f32 %v125, %v125
    %v222 = vmul.f32 %v126, %v126
    %v223 = vmul.f32 %v127, %v127
    %v224 = vmul.f32 %v128, %v128
    %v225 = vmul.f32 %v129, %v129
    %v226 = vmul.f32 %v130, %v130
    %v227 = vmul.f32 %v131, %v131
    %v228 = vmul.f32 %v132, %v132
    %v229 = vmul.f32 %v133, %v133
    %v230 = vadd.f32 %v198, %v214
    %v231 = vadd.f32 %v199, %v215
    %v232 = vadd.f32 %v200, %v216
    %v233 = vadd.f32 %v201, %v217
    %v234 = vadd.f32 %v202, %v218
    %v235 = vadd.f32 %v203, %v219
    %v236 = vadd.f32 %v204, %v220
    %v237 = vadd.f32 %v205, %v221
    %v238 = vadd.f32 %v206, %v222
    %v239 = vadd.f32 %v207, %v223
    %v240 = vadd.f32 %v208, %v224
    %v241 = vadd.f32 %v209, %v225
    %v242 = vadd.f32 %v210, %v226
    %v243 = vadd.f32 %v211, %v227
    %v244 = vadd.f32 %v212, %v228
    %v245 = vadd.f32 %v213, %v229
    %246 = vadd.xlane.f32.xlu0 %v230
    %v247 = vpop.xlane.xlu0 %246
    %248 = vadd.xlane.f32.xlu0 %v231
    %v249 = vpop.xlane.xlu0 %248
    %250 = vadd.xlane.f32.xlu0 %v232
    %v251 = vpop.xlane.xlu0 %250
    %252 = vadd.xlane.f32.xlu0 %v233
    %v253 = vpop.xlane.xlu0 %252
    %254 = vadd.xlane.f32.xlu0 %v234
    %v255 = vpop.xlane.xlu0 %254
    %256 = vadd.xlane.f32.xlu0 %v235
    %v257 = vpop.xlane.xlu0 %256
    %258 = vadd.xlane.f32.xlu0 %v236
    %v259 = vpop.xlane.xlu0 %258
    %260 = vadd.xlane.f32.xlu0 %v237
    %v261 = vpop.xlane.xlu0 %260
    %262 = vadd.xlane.f32.xlu0 %v238
    %v263 = vpop.xlane.xlu0 %262
    %264 = vadd.xlane.f32.xlu0 %v239
    %v265 = vpop.xlane.xlu0 %264
    %266 = vadd.xlane.f32.xlu0 %v240
    %v267 = vpop.xlane.xlu0 %266
    %268 = vadd.xlane.f32.xlu0 %v241
    %v269 = vpop.xlane.xlu0 %268
    %270 = vadd.xlane.f32.xlu0 %v242
    %v271 = vpop.xlane.xlu0 %270
    %272 = vadd.xlane.f32.xlu0 %v243
    %v273 = vpop.xlane.xlu0 %272
    %274 = vadd.xlane.f32.xlu0 %v244
    %v275 = vpop.xlane.xlu0 %274
    %276 = vadd.xlane.f32.xlu0 %v245
    %v277 = vpop.xlane.xlu0 %276
    %v278 = vmul.f32 %v247, 0.00390625
    %v279 = vmul.f32 %v249, 0.00390625
    %v280 = vmul.f32 %v251, 0.00390625
    %v281 = vmul.f32 %v253, 0.00390625
    %v282 = vmul.f32 %v255, 0.00390625
    %v283 = vmul.f32 %v257, 0.00390625
    %v284 = vmul.f32 %v259, 0.00390625
    %v285 = vmul.f32 %v261, 0.00390625
    %v286 = vmul.f32 %v263, 0.00390625
    %v287 = vmul.f32 %v265, 0.00390625
    %v288 = vmul.f32 %v267, 0.00390625
    %v289 = vmul.f32 %v269, 0.00390625
    %v290 = vmul.f32 %v271, 0.00390625
    %v291 = vmul.f32 %v273, 0.00390625
    %v292 = vmul.f32 %v275, 0.00390625
    %v293 = vmul.f32 %v277, 0.00390625
    %v294 = vmul.f32 %v182, %v182
    %v295 = vmul.f32 %v183, %v183
    %v296 = vmul.f32 %v184, %v184
    %v297 = vmul.f32 %v185, %v185
    %v298 = vmul.f32 %v186, %v186
    %v299 = vmul.f32 %v187, %v187
    %v300 = vmul.f32 %v188, %v188
    %v301 = vmul.f32 %v189, %v189
    %v302 = vmul.f32 %v190, %v190
    %v303 = vmul.f32 %v191, %v191
    %v304 = vmul.f32 %v192, %v192
    %v305 = vmul.f32 %v193, %v193
    %v306 = vmul.f32 %v194, %v194
    %v307 = vmul.f32 %v195, %v195
    %v308 = vmul.f32 %v196, %v196
    %v309 = vmul.f32 %v197, %v197
    %v310 = vsub.f32 %v278, %v294
    %v311 = vsub.f32 %v279, %v295
    %v312 = vsub.f32 %v280, %v296
    %v313 = vsub.f32 %v281, %v297
    %v314 = vsub.f32 %v282, %v298
    %v315 = vsub.f32 %v283, %v299
    %v316 = vsub.f32 %v284, %v300
    %v317 = vsub.f32 %v285, %v301
    %v318 = vsub.f32 %v286, %v302
    %v319 = vsub.f32 %v287, %v303
    %v320 = vsub.f32 %v288, %v304
    %v321 = vsub.f32 %v289, %v305
    %v322 = vsub.f32 %v290, %v306
    %v323 = vsub.f32 %v291, %v307
    %v324 = vsub.f32 %v292, %v308
    %v325 = vsub.f32 %v293, %v309
    %v326 = vadd.f32 %v310, 1e-05
    %v327 = vadd.f32 %v311, 1e-05
    %v328 = vadd.f32 %v312, 1e-05
    %v329 = vadd.f32 %v313, 1e-05
    %v330 = vadd.f32 %v314, 1e-05
    %v331 = vadd.f32 %v315, 1e-05
    %v332 = vadd.f32 %v316, 1e-05
    %v333 = vadd.f32 %v317, 1e-05
    %v334 = vadd.f32 %v318, 1e-05
    %v335 = vadd.f32 %v319, 1e-05
    %v336 = vadd.f32 %v320, 1e-05
    %v337 = vadd.f32 %v321, 1e-05
    %v338 = vadd.f32 %v322, 1e-05
    %v339 = vadd.f32 %v323, 1e-05
    %v340 = vadd.f32 %v324, 1e-05
    %v341 = vadd.f32 %v325, 1e-05
    %v342 = vrsqrt.pop %v326
    %v343 = vmul.f32 %v342, %v326
    %v344 = vmul.f32 %v343, %v342
    %v345 = vmul.f32 0.5, %v344
    %v346 = vsub.f32 1.5, %v345
    %v347 = vmul.f32 %v342, %v346
    %vm348 = vweird.f32 %v326
    %vm349 = vweird.f32 %v342
    %vm350 = vmor %vm348, %vm349
    %v351 = vsel %vm350, %v342, %v347
    %v352 = vrsqrt.pop %v327
    %v353 = vmul.f32 %v352, %v327
    %v354 = vmul.f32 %v353, %v352
    %v355 = vmul.f32 0.5, %v354
    %v356 = vsub.f32 1.5, %v355
    %v357 = vmul.f32 %v352, %v356
    %vm358 = vweird.f32 %v327
    %vm359 = vweird.f32 %v352
    %vm360 = vmor %vm358, %vm359
    %v361 = vsel %vm360, %v352, %v357
    %v362 = vrsqrt.pop %v328
    %v363 = vmul.f32 %v362, %v328
    %v364 = vmul.f32 %v363, %v362
    %v365 = vmul.f32 0.5, %v364
    %v366 = vsub.f32 1.5, %v365
    %v367 = vmul.f32 %v362, %v366
    %vm368 = vweird.f32 %v328
    %vm369 = vweird.f32 %v362
    %vm370 = vmor %vm368, %vm369
    %v371 = vsel %vm370, %v362, %v367
    %v372 = vrsqrt.pop %v329
    %v373 = vmul.f32 %v372, %v329
    %v374 = vmul.f32 %v373, %v372
    %v375 = vmul.f32 0.5, %v374
    %v376 = vsub.f32 1.5, %v375
    %v377 = vmul.f32 %v372, %v376
    %vm378 = vweird.f32 %v329
    %vm379 = vweird.f32 %v372
    %vm380 = vmor %vm378, %vm379
    %v381 = vsel %vm380, %v372, %v377
    %v382 = vrsqrt.pop %v330
    %v383 = vmul.f32 %v382, %v330
    %v384 = vmul.f32 %v383, %v382
    %v385 = vmul.f32 0.5, %v384
    %v386 = vsub.f32 1.5, %v385
    %v387 = vmul.f32 %v382, %v386
    %vm388 = vweird.f32 %v330
    %vm389 = vweird.f32 %v382
    %vm390 = vmor %vm388, %vm389
    %v391 = vsel %vm390, %v382, %v387
    %v392 = vrsqrt.pop %v331
    %v393 = vmul.f32 %v392, %v331
    %v394 = vmul.f32 %v393, %v392
    %v395 = vmul.f32 0.5, %v394
    %v396 = vsub.f32 1.5, %v395
    %v397 = vmul.f32 %v392, %v396
    %vm398 = vweird.f32 %v331
    %vm399 = vweird.f32 %v392
    %vm400 = vmor %vm398, %vm399
    %v401 = vsel %vm400, %v392, %v397
    %v402 = vrsqrt.pop %v332
    %v403 = vmul.f32 %v402, %v332
    %v404 = vmul.f32 %v403, %v402
    %v405 = vmul.f32 0.5, %v404
    %v406 = vsub.f32 1.5, %v405
    %v407 = vmul.f32 %v402, %v406
    %vm408 = vweird.f32 %v332
    %vm409 = vweird.f32 %v402
    %vm410 = vmor %vm408, %vm409
    %v411 = vsel %vm410, %v402, %v407
    %v412 = vrsqrt.pop %v333
    %v413 = vmul.f32 %v412, %v333
    %v414 = vmul.f32 %v413, %v412
    %v415 = vmul.f32 0.5, %v414
    %v416 = vsub.f32 1.5, %v415
    %v417 = vmul.f32 %v412, %v416
    %vm418 = vweird.f32 %v333
    %vm419 = vweird.f32 %v412
    %vm420 = vmor %vm418, %vm419
    %v421 = vsel %vm420, %v412, %v417
    %v422 = vrsqrt.pop %v334
    %v423 = vmul.f32 %v422, %v334
    %v424 = vmul.f32 %v423, %v422
    %v425 = vmul.f32 0.5, %v424
    %v426 = vsub.f32 1.5, %v425
    %v427 = vmul.f32 %v422, %v426
    %vm428 = vweird.f32 %v334
    %vm429 = vweird.f32 %v422
    %vm430 = vmor %vm428, %vm429
    %v431 = vsel %vm430, %v422, %v427
    %v432 = vrsqrt.pop %v335
    %v433 = vmul.f32 %v432, %v335
    %v434 = vmul.f32 %v433, %v432
    %v435 = vmul.f32 0.5, %v434
    %v436 = vsub.f32 1.5, %v435
    %v437 = vmul.f32 %v432, %v436
    %vm438 = vweird.f32 %v335
    %vm439 = vweird.f32 %v432
    %vm440 = vmor %vm438, %vm439
    %v441 = vsel %vm440, %v432, %v437
    %v442 = vrsqrt.pop %v336
    %v443 = vmul.f32 %v442, %v336
    %v444 = vmul.f32 %v443, %v442
    %v445 = vmul.f32 0.5, %v444
    %v446 = vsub.f32 1.5, %v445
    %v447 = vmul.f32 %v442, %v446
    %vm448 = vweird.f32 %v336
    %vm449 = vweird.f32 %v442
    %vm450 = vmor %vm448, %vm449
    %v451 = vsel %vm450, %v442, %v447
    %v452 = vrsqrt.pop %v337
    %v453 = vmul.f32 %v452, %v337
    %v454 = vmul.f32 %v453, %v452
    %v455 = vmul.f32 0.5, %v454
    %v456 = vsub.f32 1.5, %v455
    %v457 = vmul.f32 %v452, %v456
    %vm458 = vweird.f32 %v337
    %vm459 = vweird.f32 %v452
    %vm460 = vmor %vm458, %vm459
    %v461 = vsel %vm460, %v452, %v457
    %v462 = vrsqrt.pop %v338
    %v463 = vmul.f32 %v462, %v338
    %v464 = vmul.f32 %v463, %v462
    %v465 = vmul.f32 0.5, %v464
    %v466 = vsub.f32 1.5, %v465
    %v467 = vmul.f32 %v462, %v466
    %vm468 = vweird.f32 %v338
    %vm469 = vweird.f32 %v462
    %vm470 = vmor %vm468, %vm469
    %v471 = vsel %vm470, %v462, %v467
    %v472 = vrsqrt.pop %v339
    %v473 = vmul.f32 %v472, %v339
    %v474 = vmul.f32 %v473, %v472
    %v475 = vmul.f32 0.5, %v474
    %v476 = vsub.f32 1.5, %v475
    %v477 = vmul.f32 %v472, %v476
    %vm478 = vweird.f32 %v339
    %vm479 = vweird.f32 %v472
    %vm480 = vmor %vm478, %vm479
    %v481 = vsel %vm480, %v472, %v477
    %v482 = vrsqrt.pop %v340
    %v483 = vmul.f32 %v482, %v340
    %v484 = vmul.f32 %v483, %v482
    %v485 = vmul.f32 0.5, %v484
    %v486 = vsub.f32 1.5, %v485
    %v487 = vmul.f32 %v482, %v486
    %vm488 = vweird.f32 %v340
    %vm489 = vweird.f32 %v482
    %vm490 = vmor %vm488, %vm489
    %v491 = vsel %vm490, %v482, %v487
    %v492 = vrsqrt.pop %v341
    %v493 = vmul.f32 %v492, %v341
    %v494 = vmul.f32 %v493, %v492
    %v495 = vmul.f32 0.5, %v494
    %v496 = vsub.f32 1.5, %v495
    %v497 = vmul.f32 %v492, %v496
    %vm498 = vweird.f32 %v341
    %vm499 = vweird.f32 %v492
    %vm500 = vmor %vm498, %vm499
    %v501 = vsel %vm500, %v492, %v497
    %v502 = vsub.f32 %v100, %v182
    %v503 = vsub.f32 %v101, %v183
    %v504 = vsub.f32 %v102, %v184
    %v505 = vsub.f32 %v103, %v185
    %v506 = vsub.f32 %v104, %v186
    %v507 = vsub.f32 %v105, %v187
    %v508 = vsub.f32 %v106, %v188
    %v509 = vsub.f32 %v107, %v189
    %v510 = vsub.f32 %v108, %v190
    %v511 = vsub.f32 %v109, %v191
    %v512 = vsub.f32 %v110, %v192
    %v513 = vsub.f32 %v111, %v193
    %v514 = vsub.f32 %v112, %v194
    %v515 = vsub.f32 %v113, %v195
    %v516 = vsub.f32 %v114, %v196
    %v517 = vsub.f32 %v115, %v197
    %v518 = vmul.f32 %v502, %v351
    %v519 = vmul.f32 %v503, %v361
    %v520 = vmul.f32 %v504, %v371
    %v521 = vmul.f32 %v505, %v381
    %v522 = vmul.f32 %v506, %v391
    %v523 = vmul.f32 %v507, %v401
    %v524 = vmul.f32 %v508, %v411
    %v525 = vmul.f32 %v509, %v421
    %v526 = vmul.f32 %v510, %v431
    %v527 = vmul.f32 %v511, %v441
    %v528 = vmul.f32 %v512, %v451
    %v529 = vmul.f32 %v513, %v461
    %v530 = vmul.f32 %v514, %v471
    %v531 = vmul.f32 %v515, %v481
    %v532 = vmul.f32 %v516, %v491
    %v533 = vmul.f32 %v517, %v501
    %v534 = vsub.f32 %v118, %v182
    %v535 = vsub.f32 %v119, %v183
    %v536 = vsub.f32 %v120, %v184
    %v537 = vsub.f32 %v121, %v185
    %v538 = vsub.f32 %v122, %v186
    %v539 = vsub.f32 %v123, %v187
    %v540 = vsub.f32 %v124, %v188
    %v541 = vsub.f32 %v125, %v189
    %v542 = vsub.f32 %v126, %v190
    %v543 = vsub.f32 %v127, %v191
    %v544 = vsub.f32 %v128, %v192
    %v545 = vsub.f32 %v129, %v193
    %v546 = vsub.f32 %v130, %v194
    %v547 = vsub.f32 %v131, %v195
    %v548 = vsub.f32 %v132, %v196
    %v549 = vsub.f32 %v133, %v197
    %v550 = vmul.f32 %v534, %v351
    %v551 = vmul.f32 %v535, %v361
    %v552 = vmul.f32 %v536, %v371
    %v553 = vmul.f32 %v537, %v381
    %v554 = vmul.f32 %v538, %v391
    %v555 = vmul.f32 %v539, %v401
    %v556 = vmul.f32 %v540, %v411
    %v557 = vmul.f32 %v541, %v421
    %v558 = vmul.f32 %v542, %v431
    %v559 = vmul.f32 %v543, %v441
    %v560 = vmul.f32 %v544, %v451
    %v561 = vmul.f32 %v545, %v461
    %v562 = vmul.f32 %v546, %v471
    %v563 = vmul.f32 %v547, %v481
    %v564 = vmul.f32 %v548, %v491
    %v565 = vmul.f32 %v549, %v501
    %566 = vmatpush.msra.mxu0 %v96
    %567 = vmatpush.msra.mxu0 %v95
    %568 = vmatpush.msra.mxu0 %v94
    %569 = vmatpush.msra.mxu0 %v93
    %570 = vmatpush.msra.mxu0 %v92
    %571 = vmatpush.msra.mxu0 %v91
    %572 = vmatpush.msra.mxu0 %v90
    %573 = vmatpush.msra.mxu0 %v89
    %574 = vmatpush.msra.mxu0 %v88
    %575 = vmatpush.msra.mxu0 %v87
    %576 = vmatpush.msra.mxu0 %v86
    %577 = vmatpush.msra.mxu0 %v85
    %578 = vmatpush.msra.mxu0 %v84
    %579 = vmatpush.msra.mxu0 %v83
    %580 = vmatpush.msra.mxu0 %v82
    %581 = vmatpush.msra.mxu0 %v81
    %582 = vmatmul.f32.gmra.mxu0 %v550
    %v583 = vpop.f32.mrf.mxu0
    %v584 = vadd.f32 0.0, %v583
    %585 = vmatmul.f32.gmra.mxu0 %v551
    %v586 = vpop.f32.mrf.mxu0
    %v587 = vadd.f32 0.0, %v586
    %588 = vmatmul.f32.gmra.mxu0 %v552
    %v589 = vpop.f32.mrf.mxu0
    %v590 = vadd.f32 0.0, %v589
    %591 = vmatmul.f32.gmra.mxu0 %v553
    %v592 = vpop.f32.mrf.mxu0
    %v593 = vadd.f32 0.0, %v592
    %594 = vmatmul.f32.gmra.mxu0 %v554
    %v595 = vpop.f32.mrf.mxu0
    %v596 = vadd.f32 0.0, %v595
    %597 = vmatmul.f32.gmra.mxu0 %v555
    %v598 = vpop.f32.mrf.mxu0
    %v599 = vadd.f32 0.0, %v598
    %600 = vmatmul.f32.gmra.mxu0 %v556
    %v601 = vpop.f32.mrf.mxu0
    %v602 = vadd.f32 0.0, %v601
    %603 = vmatmul.f32.gmra.mxu0 %v557
    %v604 = vpop.f32.mrf.mxu0
    %v605 = vadd.f32 0.0, %v604
    %606 = vmatmul.f32.gmra.mxu0 %v558
    %v607 = vpop.f32.mrf.mxu0
    %v608 = vadd.f32 0.0, %v607
    %609 = vmatmul.f32.gmra.mxu0 %v559
    %v610 = vpop.f32.mrf.mxu0
    %v611 = vadd.f32 0.0, %v610
    %612 = vmatmul.f32.gmra.mxu0 %v560
    %v613 = vpop.f32.mrf.mxu0
    %v614 = vadd.f32 0.0, %v613
    %615 = vmatmul.f32.gmra.mxu0 %v561
    %v616 = vpop.f32.mrf.mxu0
    %v617 = vadd.f32 0.0, %v616
    %618 = vmatmul.f32.gmra.mxu0 %v562
    %v619 = vpop.f32.mrf.mxu0
    %v620 = vadd.f32 0.0, %v619
    %621 = vmatmul.f32.gmra.mxu0 %v563
    %v622 = vpop.f32.mrf.mxu0
    %v623 = vadd.f32 0.0, %v622
    %624 = vmatmul.f32.gmra.mxu0 %v564
    %v625 = vpop.f32.mrf.mxu0
    %v626 = vadd.f32 0.0, %v625
    %627 = vmatmul.f32.gmra.mxu0 %v565
    %v628 = vpop.f32.mrf.mxu0
    %v629 = vadd.f32 0.0, %v628
    %630 = vdwg.mxu0
    %631 = vmatpush.msra.mxu0 %v80
    %632 = vmatpush.msra.mxu0 %v79
    %633 = vmatpush.msra.mxu0 %v78
    %634 = vmatpush.msra.mxu0 %v77
    %635 = vmatpush.msra.mxu0 %v76
    %636 = vmatpush.msra.mxu0 %v75
    %637 = vmatpush.msra.mxu0 %v74
    %638 = vmatpush.msra.mxu0 %v73
    %639 = vmatpush.msra.mxu0 %v72
    %640 = vmatpush.msra.mxu0 %v71
    %641 = vmatpush.msra.mxu0 %v70
    %642 = vmatpush.msra.mxu0 %v69
    %643 = vmatpush.msra.mxu0 %v68
    %644 = vmatpush.msra.mxu0 %v67
    %645 = vmatpush.msra.mxu0 %v66
    %646 = vmatpush.msra.mxu0 %v65
    %647 = vmatmul.f32.gmra.mxu0 %v518
    %v648 = vpop.f32.mrf.mxu0
    %v649 = vadd.f32 %v584, %v648
    %650 = vmatmul.f32.gmra.mxu0 %v519
    %v651 = vpop.f32.mrf.mxu0
    %v652 = vadd.f32 %v587, %v651
    %653 = vmatmul.f32.gmra.mxu0 %v520
    %v654 = vpop.f32.mrf.mxu0
    %v655 = vadd.f32 %v590, %v654
    %656 = vmatmul.f32.gmra.mxu0 %v521
    %v657 = vpop.f32.mrf.mxu0
    %v658 = vadd.f32 %v593, %v657
    %659 = vmatmul.f32.gmra.mxu0 %v522
    %v660 = vpop.f32.mrf.mxu0
    %v661 = vadd.f32 %v596, %v660
    %662 = vmatmul.f32.gmra.mxu0 %v523
    %v663 = vpop.f32.mrf.mxu0
    %v664 = vadd.f32 %v599, %v663
    %665 = vmatmul.f32.gmra.mxu0 %v524
    %v666 = vpop.f32.mrf.mxu0
    %v667 = vadd.f32 %v602, %v666
    %668 = vmatmul.f32.gmra.mxu0 %v525
    %v669 = vpop.f32.mrf.mxu0
    %v670 = vadd.f32 %v605, %v669
    %671 = vmatmul.f32.gmra.mxu0 %v526
    %v672 = vpop.f32.mrf.mxu0
    %v673 = vadd.f32 %v608, %v672
    %674 = vmatmul.f32.gmra.mxu0 %v527
    %v675 = vpop.f32.mrf.mxu0
    %v676 = vadd.f32 %v611, %v675
    %677 = vmatmul.f32.gmra.mxu0 %v528
    %v678 = vpop.f32.mrf.mxu0
    %v679 = vadd.f32 %v614, %v678
    %680 = vmatmul.f32.gmra.mxu0 %v529
    %v681 = vpop.f32.mrf.mxu0
    %v682 = vadd.f32 %v617, %v681
    %683 = vmatmul.f32.gmra.mxu0 %v530
    %v684 = vpop.f32.mrf.mxu0
    %v685 = vadd.f32 %v620, %v684
    %686 = vmatmul.f32.gmra.mxu0 %v531
    %v687 = vpop.f32.mrf.mxu0
    %v688 = vadd.f32 %v623, %v687
    %689 = vmatmul.f32.gmra.mxu0 %v532
    %v690 = vpop.f32.mrf.mxu0
    %v691 = vadd.f32 %v626, %v690
    %692 = vmatmul.f32.gmra.mxu0 %v533
    %v693 = vpop.f32.mrf.mxu0
    %v694 = vadd.f32 %v629, %v693
    %695 = vdwg.mxu0
    %v697 = vperm.slane %v97, 0
    %v699 = vadd.f32 %v649, %v697
    %v700 = vadd.f32 %v652, %v697
    %v701 = vadd.f32 %v655, %v697
    %v702 = vadd.f32 %v658, %v697
    %v703 = vadd.f32 %v661, %v697
    %v704 = vadd.f32 %v664, %v697
    %v705 = vadd.f32 %v667, %v697
    %v706 = vadd.f32 %v670, %v697
    %v707 = vadd.f32 %v673, %v697
    %v708 = vadd.f32 %v676, %v697
    %v709 = vadd.f32 %v679, %v697
    %v710 = vadd.f32 %v682, %v697
    %v711 = vadd.f32 %v685, %v697
    %v712 = vadd.f32 %v688, %v697
    %v713 = vadd.f32 %v691, %v697
    %v714 = vadd.f32 %v694, %v697
    %715 = vst [vmem:[#allocation8] sm:$0xff] %v699
    %716 = vst [vmem:[#allocation8 + $0x8] sm:$0xff] %v700
    %717 = vst [vmem:[#allocation8 + $0x10] sm:$0xff] %v701
    %718 = vst [vmem:[#allocation8 + $0x18] sm:$0xff] %v702
    %719 = vst [vmem:[#allocation8 + $0x20] sm:$0xff] %v703
    %720 = vst [vmem:[#allocation8 + $0x28] sm:$0xff] %v704
    %721 = vst [vmem:[#allocation8 + $0x30] sm:$0xff] %v705
    %722 = vst [vmem:[#allocation8 + $0x38] sm:$0xff] %v706
    %723 = vst [vmem:[#allocation8 + $0x40] sm:$0xff] %v707
    %724 = vst [vmem:[#allocation8 + $0x48] sm:$0xff] %v708
    %725 = vst [vmem:[#allocation8 + $0x50] sm:$0xff] %v709
    %726 = vst [vmem:[#allocation8 + $0x58] sm:$0xff] %v710
    %727 = vst [vmem:[#allocation8 + $0x60] sm:$0xff] %v711
    %728 = vst [vmem:[#allocation8 + $0x68] sm:$0xff] %v712
    %729 = vst [vmem:[#allocation8 + $0x70] sm:$0xff] %v713
    %730 = vst [vmem:[#allocation8 + $0x78] sm:$0xff] %v714
    // Predicated region
    $region30: #{tpu_custom_call.1} parent=1 // pred_check
      _
    $region31: #{tpu_custom_call.1} parent=1 // pred_check_branch
      %732 = sbr.rel (0) target = $region33
    $region32: #{tpu_custom_call.1} parent=1 // pred_region
      %734 = vsyncadd [#allocation4], 0
      %s735 = sshll.u32 [#allocation8], 4
      %s736 = int_to_ptr.vmem [resolvable:$true] %s735
      %s737 = sshll.u32 %s4, 4
      %s738 = int_to_ptr.hbm [resolvable:$true] %s737
      %743 = dma.vmem_to_hbm [thread:$0]  %s736, 2048, %s738, [#allocation4], 128, 128, 8
    $region33: #{tpu_custom_call.1} parent=1 // pred_fallthru
      _
    // Predicated region
    $region34: #{tpu_custom_call.1} parent=1 // pred_check
      _
    $region35: #{tpu_custom_call.1} parent=1 // pred_check_branch
      %745 = sbr.rel (0) target = $region37
    $region36: #{tpu_custom_call.1} parent=1 // pred_region
      %747 = dma.done [#allocation4], 2048
    $region37: #{tpu_custom_call.1} parent=1 // pred_fallthru
      _
    %748 = vsyncpa [#allocation3], 1
    %749 = vsyncpa [#allocation6], 1
    %750 = vsyncpa [#allocation4], 1

</llo_original>
